<compile_context>
chip_gen: v7x
topology: tpu7x:2x2x1
jax: 0.10.0
libtpu: 0.0.40
codegen_flags: <defaults>
</compile_context>

<pallas_src>
import functools

import jax
import jax.numpy as jnp
from jax.experimental import pallas as pl
from jax.experimental.pallas import tpu as pltpu


def _pow_const(q, gamma):
    """q ** gamma for a compile-time gamma.

    Small integer exponents become plain multiplies (exponentiation by
    squaring, unrolled at trace time) instead of an exp/log pair.
    """
    g = float(gamma)
    if g.is_integer() and 0 <= int(g) <= 16:
        n = int(g)
        if n == 0:
            return jnp.ones_like(q)
        result = None
        base = q
        while n:
            if n & 1:
                result = base if result is None else result * base
            n >>= 1
            if n:
                base = base * base
        return result
    return q ** g  # general (non-integer) fallback


def _target_prob_kernel(x_ref, t_ref, p_ref):
    """Per-row softmax probability of the target class.

    x_ref: (TB, C_pad) f32 logits tile (padded classes hold -1e30).
    t_ref: (TB, 1)     i32 labels.
    p_ref: (TB, 1)     f32 output, p_t = softmax(x)[row, t[row]].
    """
    x = x_ref[...]                                    # (TB, Cp)
    t = t_ref[...]                                    # (TB, 1)

    # Numerically stable softmax denominator over the class (lane) axis.
    m = jnp.max(x, axis=-1, keepdims=True)            # (TB, 1)   XLU
    e = jnp.exp(x - m)                                 # (TB, Cp)  EUP (only full-tile transcendental)
    s = jnp.sum(e, axis=-1, keepdims=True)             # (TB, 1)   XLU

    # One-hot gather via a (1, Cp) iota broadcast against the (TB, 1) labels.
    cls = jax.lax.broadcasted_iota(jnp.int32, (1, x.shape[-1]), 1)
    hit = cls == t                                      # (TB, Cp) via broadcasting
    e_t = jnp.sum(jnp.where(hit, e, 0.0), axis=-1, keepdims=True)   # (TB, 1)

    p_ref[...] = e_t / s                                # per-row target-class probability


def focal_loss(x, target, weights, *, alpha=1.0, gamma=3, eps=1e-7,
               size_average=True,
               vmem_budget_bytes=24 * 1024 * 1024,
               vmem_limit_bytes=48 * 1024 * 1024):
    """x: [B, C] float logits; target: [B] int labels; weights: [C] floats."""
    B, C = x.shape
    x = x.astype(jnp.float32)
    target = target.astype(jnp.int32)
    w_norm = (weights / jnp.sum(weights)).astype(jnp.float32)

    # --- pad class axis to a multiple of 128 for lane-dense logits tiles ----
    # Padded classes get very negative logits -> exp underflows to exactly 0,
    # so the softmax denominator and the gathered numerator are unchanged.
    C_pad = ((C + 127) // 128) * 128
    if C_pad != C:
        x = jnp.pad(x, ((0, 0), (0, C_pad - C)), constant_values=-1e30)

    # --- batch tile sizing ---------------------------------------------------
    # Budget counts the double-buffered logits tile PLUS the lane-padded
    # (tile_b, 1) labels and output buffers (each pads to 128 lanes in VMEM).
    narrow_row_bytes = 2 * 128 * 4                    # labels + output, lane-padded, per row
    bytes_per_row = 2 * (C_pad * 4 + narrow_row_bytes)  # x2 for double buffering
    max_rows_vmem = max(8, vmem_budget_bytes // bytes_per_row)
    # Keep at least 2 grid steps whenever B > 8 so the "parallel" axis spans
    # both v7x TensorCores (no-op on v5e/v6e).
    half_cap = max(8, 8 * ((B + 15) // 16))           # = round8_up(ceil(B/2))
    tile_b = min(max_rows_vmem, half_cap, 4096)
    tile_b = max(8, (tile_b // 8) * 8)

    # --- pad batch to a multiple of tile_b (pad rows are discarded later) ----
    B_pad = ((B + tile_b - 1) // tile_b) * tile_b
    t2d = target.reshape(B, 1)
    if B_pad != B:
        x = jnp.pad(x, ((0, B_pad - B), (0, 0)))
        t2d = jnp.pad(t2d, ((0, B_pad - B), (0, 0)))   # label 0 is fine; rows sliced off

    p_rows = pl.pallas_call(
        _target_prob_kernel,
        out_shape=jax.ShapeDtypeStruct((B_pad, 1), jnp.float32),
        grid_spec=pl.GridSpec(
            grid=(B_pad // tile_b,),
            in_specs=[
                pl.BlockSpec((tile_b, C_pad), lambda i: (i, 0)),   # logits tile
                pl.BlockSpec((tile_b, 1), lambda i: (i, 0)),       # labels tile
            ],
            out_specs=pl.BlockSpec((tile_b, 1), lambda i: (i, 0)),  # per-row p_t
        ),
        compiler_params=pltpu.CompilerParams(
            dimension_semantics=("parallel",),          # independent batch tiles
            vmem_limit_bytes=vmem_limit_bytes),
    )(x, t2d)

    # --- O(B) lane-dense epilogue in XLA (per performance review) -----------
    p_t = jnp.clip(p_rows[:B, 0], eps, 1.0 - eps)       # (B,)
    w_t = jnp.take(w_norm, target)                       # (B,) tiny gather from length-C vector
    loss_rows = (-float(alpha)) * _pow_const(1.0 - p_t, gamma) * jnp.log(p_t) * w_t
    total = jnp.sum(loss_rows)
    if size_average:
        total = total / jnp.float32(B * C)               # torch .mean() over the full BxC matrix
    return total


def _focal_loss_ref(x, target, weights, *, alpha=1.0, gamma=3, eps=1e-7,
                    size_average=True):
    B, C = x.shape
    w = weights / jnp.sum(weights)
    y = jax.nn.one_hot(target, C, dtype=jnp.float32)
    p = jax.nn.softmax(x, axis=-1)
    p = jnp.clip(p, eps, 1.0 - eps)
    loss = -y * jnp.log(p)
    loss = alpha * (1.0 - p) ** gamma * loss
    loss = loss * w[None, :]
    return jnp.mean(loss) if size_average else jnp.sum(loss)


if __name__ == "__main__":
    B, C = 16, 32
    key = jax.random.PRNGKey(0)
    kx, kt = jax.random.split(key)

    x = jax.random.normal(kx, (B, C), dtype=jnp.float32)
    target = jax.random.randint(kt, (B,), 0, C, dtype=jnp.int32)
    # deterministic per-class weights (module normalizes them internally)
    weights = jnp.arange(1, C + 1, dtype=jnp.float32)

    loss = focal_loss(x, target, weights, alpha=1.0, gamma=3, eps=1e-7,
                      size_average=True)
    loss = jax.block_until_ready(loss)

    ref = _focal_loss_ref(x, target, weights, alpha=1.0, gamma=3, eps=1e-7,
                          size_average=True)
    assert jnp.allclose(loss, ref, rtol=1e-5, atol=1e-6), (loss, ref)

    # also exercise the remainder-handling path (B not divisible by the tile)
    # and size_average=False
    B2 = 13
    x2 = jax.random.normal(kx, (B2, C), dtype=jnp.float32)
    t2 = jax.random.randint(kt, (B2,), 0, C, dtype=jnp.int32)
    loss2 = jax.block_until_ready(focal_loss(x2, t2, weights, size_average=False))
    ref2 = _focal_loss_ref(x2, t2, weights, size_average=False)
    assert jnp.allclose(loss2, ref2, rtol=1e-5, atol=1e-6), (loss2, ref2)

    print("KERNEL_OK")
</pallas_src>

<mosaic_0001>
module attributes {stable_mosaic.version = 11 : i64} {
  func.func @_target_prob_kernel(%arg0: i32, %arg1: memref<8x128xf32, #tpu.memory_space<vmem>>, %arg2: memref<8x1xi32, #tpu.memory_space<vmem>>, %arg3: memref<8x1xf32, #tpu.memory_space<vmem>>) attributes {dimension_semantics = [#tpu.dimension_semantics<parallel>], iteration_bounds = array<i64: 2>, scalar_prefetch = 0 : i64, scratch_operands = 0 : i64, tpu.core_type = #tpu.core_type<tc>, window_params = [{transform_indices = @transform_0, window_bounds = array<i64: 8, 128>}, {transform_indices = @transform_1, window_bounds = array<i64: 8, 1>}, {transform_indices = @transform_2, window_bounds = array<i64: 8, 1>}]} {
    %c0 = arith.constant 0 : index
    %c0_0 = arith.constant 0 : index
    %0 = vector.load %arg1[%c0, %c0_0] : memref<8x128xf32, #tpu.memory_space<vmem>>, vector<8x128xf32>
    %c0_1 = arith.constant 0 : index
    %c0_2 = arith.constant 0 : index
    %1 = vector.load %arg2[%c0_1, %c0_2] : memref<8x1xi32, #tpu.memory_space<vmem>>, vector<8x1xi32>
    %cst = arith.constant dense<0xFF800000> : vector<8xf32>
    %2 = vector.multi_reduction <maximumf>, %0, %cst [1] : vector<8x128xf32> to vector<8xf32>
    %3 = vector.shape_cast %2 : vector<8xf32> to vector<8x1xf32>
    %4 = vector.broadcast %3 : vector<8x1xf32> to vector<8x128xf32>
    %5 = arith.subf %0, %4 : vector<8x128xf32>
    %6 = math.exp %5 : vector<8x128xf32>
    %cst_3 = arith.constant dense<0.000000e+00> : vector<8xf32>
    %7 = vector.multi_reduction <add>, %6, %cst_3 [1] : vector<8x128xf32> to vector<8xf32>
    %8 = vector.shape_cast %7 : vector<8xf32> to vector<8x1xf32>
    %9 = tpu.iota {dimensions = array<i32: 1>} : vector<1x128xi32>
    %10 = vector.broadcast %9 : vector<1x128xi32> to vector<8x128xi32>
    %11 = vector.broadcast %1 : vector<8x1xi32> to vector<8x128xi32>
    %12 = arith.cmpi eq, %10, %11 : vector<8x128xi32>
    %cst_4 = arith.constant 0.000000e+00 : f32
    %13 = vector.broadcast %cst_4 : f32 to vector<8x128xf32>
    %14 = arith.select %12, %6, %13 : vector<8x128xi1>, vector<8x128xf32>
    %cst_5 = arith.constant dense<0.000000e+00> : vector<8xf32>
    %15 = vector.multi_reduction <add>, %14, %cst_5 [1] : vector<8x128xf32> to vector<8xf32>
    %16 = vector.shape_cast %15 : vector<8xf32> to vector<8x1xf32>
    %17 = arith.divf %16, %8 : vector<8x1xf32>
    %c0_6 = arith.constant 0 : index
    %c0_7 = arith.constant 0 : index
    %18 = vector.load %arg3[%c0_6, %c0_7] : memref<8x1xf32, #tpu.memory_space<vmem>>, vector<8x1xf32>
    tpu.vector_store %arg3[%c0_6, %c0_7], %17 {strides = array<i32>} : memref<8x1xf32, #tpu.memory_space<vmem>>, vector<8x1xf32>,
    return
  }
  func.func @transform_0(%arg0: i32) -> (i32, i32) {
    %c0_i32 = arith.constant 0 : i32
    %c0_i32_0 = arith.constant 0 : i32
    return %arg0, %c0_i32 : i32, i32
  }
  func.func @transform_1(%arg0: i32) -> (i32, i32) {
    %c0_i32 = arith.constant 0 : i32
    %c0_i32_0 = arith.constant 0 : i32
    return %arg0, %c0_i32 : i32, i32
  }
  func.func @transform_2(%arg0: i32) -> (i32, i32) {
    %c0_i32 = arith.constant 0 : i32
    %c0_i32_0 = arith.constant 0 : i32
    return %arg0, %c0_i32 : i32, i32
  }
}

</mosaic_0001>

<llo_original>
// kernel: tpu_custom_call.1
$region0: #{tpu_custom_call.1}
  #allocation0 [shape = 'u32[]', space=smem, size = 0x4, offset = 0x4, fixed_abs, tag = 'smem constant byte address 0x4 - core index']
  #allocation1 [shape = 'u32[144,128]{1,0:T(1,128)}', space=vmem, size = 0x12000, scoped, tag = 'internal scratch']
  %s0 = inlined_call_operand.vmem [shape: f32[16,128], index: 0, kind: input, shape index: {}]
  %s1 = inlined_call_operand.vmem [shape: s32[16,1], index: 1, kind: input, shape index: {}]
  %s2 = inlined_call_operand.vmem [shape: f32[16,1], index: 2, kind: output, shape index: {}]
  %s3 = sld [smem:[#allocation0]]
  $region41: #{tpu_custom_call.1} parent=0
    _
  %s5 = ssub.s32 1, %s3
  %s6 = scalar_select 0, %s5, %s3
  loop: start=0, step=1, limit=4
  $region2: #{tpu_custom_call.1} parent=0 // loop_pre_header
    _
  $region3: #{tpu_custom_call.1} parent=0 // loop_header
    %s8 = sphi 0, %s12
    %p9 = scmp.ge.s32.totalorder %s8, 4
    %s18 = sphi 0, %s20
    %s21 = sphi 0, %s18
    %s22 = sphi 0, %s21
    %s38 = sphi 0, %s22
    %s44 = sphi 0, %s46
    %s47 = sphi 0, %s44
    %s48 = sphi 0, %s47
    %s64 = sphi 0, %s48
    %s70 = sphi 0, %s72
    %s73 = sphi 0, %s70
    %s74 = sphi 0, %s73
    %s90 = sphi 0, %s74
  $region4: #{tpu_custom_call.1} parent=0 // loop_header_branch
    %11 = sbr.rel (%p9) target = $region8
  $region5: #{tpu_custom_call.1} parent=0 // loop_body
    %s13 = ssub.s32 %s8, 1
    %s14 = ssub.s32 %s8, 2
    %s15 = sadd.s32 %s8, 1
    %s16 = ssub.s32 %s8, %s15
    %p17 = scmp.eq.s32.totalorder %s16, 0
    %s19 = sadd.s32 %s18, 1
    %s20 = scalar_select %p17, %s18, %s19
    %p23 = pneg %p17
    %p24 = scmp.eq.s32.totalorder %s8, 1
    %p25 = por %p23, %p24
    %p26 = scmp.ne.s32.totalorder %s18, %s21
    %p27 = scmp.eq.s32.totalorder %s8, 0
    %p28 = por %p26, %p27
    %p29 = scmp.ne.s32.totalorder %s18, %s21
    %p30 = scmp.eq.s32.totalorder %s13, 1
    %p31 = por %p29, %p30
    %p32 = scmp.ne.s32.totalorder %s21, %s22
    %p33 = scmp.eq.s32.totalorder %s13, 0
    %p34 = por %p32, %p33
    %p35 = scmp.ne.s32.totalorder %s21, %s22
    %p36 = scmp.eq.s32.totalorder %s14, 1
    %p37 = por %p35, %p36
    %p39 = scmp.ne.s32.totalorder %s22, %s38
    %p40 = scmp.eq.s32.totalorder %s14, 0
    %p41 = por %p39, %p40
    %s42 = ssub.s32 %s8, %s15
    %p43 = scmp.eq.s32.totalorder %s42, 0
    %s45 = sadd.s32 %s44, 1
    %s46 = scalar_select %p43, %s44, %s45
    %p49 = pneg %p43
    %p50 = scmp.eq.s32.totalorder %s8, 1
    %p51 = por %p49, %p50
    %p52 = scmp.ne.s32.totalorder %s44, %s47
    %p53 = scmp.eq.s32.totalorder %s8, 0
    %p54 = por %p52, %p53
    %p55 = scmp.ne.s32.totalorder %s44, %s47
    %p56 = scmp.eq.s32.totalorder %s13, 1
    %p57 = por %p55, %p56
    %p58 = scmp.ne.s32.totalorder %s47, %s48
    %p59 = scmp.eq.s32.totalorder %s13, 0
    %p60 = por %p58, %p59
    %p61 = scmp.ne.s32.totalorder %s47, %s48
    %p62 = scmp.eq.s32.totalorder %s14, 1
    %p63 = por %p61, %p62
    %p65 = scmp.ne.s32.totalorder %s48, %s64
    %p66 = scmp.eq.s32.totalorder %s14, 0
    %p67 = por %p65, %p66
    %s68 = ssub.s32 %s8, %s15
    %p69 = scmp.eq.s32.totalorder %s68, 0
    %s71 = sadd.s32 %s70, 1
    %s72 = scalar_select %p69, %s70, %s71
    %p75 = pneg %p69
    %p76 = scmp.eq.s32.totalorder %s8, 1
    %p77 = por %p75, %p76
    %p78 = scmp.ne.s32.totalorder %s70, %s73
    %p79 = scmp.eq.s32.totalorder %s8, 0
    %p80 = por %p78, %p79
    %p81 = scmp.ne.s32.totalorder %s70, %s73
    %p82 = scmp.eq.s32.totalorder %s13, 1
    %p83 = por %p81, %p82
    %p84 = scmp.ne.s32.totalorder %s73, %s74
    %p85 = scmp.eq.s32.totalorder %s13, 0
    %p86 = por %p84, %p85
    %p87 = scmp.ne.s32.totalorder %s73, %s74
    %p88 = scmp.eq.s32.totalorder %s14, 1
    %p89 = por %p87, %p88
    %p91 = scmp.ne.s32.totalorder %s74, %s90
    %p92 = scmp.eq.s32.totalorder %s14, 0
    %p93 = por %p91, %p92
    %p94 = scmp.le.s32.totalorder 1, %s8
    %p95 = scmp.lt.s32.totalorder %s8, 3
    %p96 = pnand %p94, %p95
    %p97 = pneg %p96
    // Predicated region
    $region9: #{tpu_custom_call.1} parent=5 // pred_check
      _
    $region10: #{tpu_custom_call.1} parent=5 // pred_check_branch
      %99 = sbr.rel (%p96) target = $region12
    $region11: #{tpu_custom_call.1} parent=5 // pred_region
      %s100 = ssub.s32 %s8, 1
    $region12: #{tpu_custom_call.1} parent=5 // pred_fallthru
      _
    %p101 = scmp.lt.s32.totalorder %s8, 2
    // Predicated region
    $region13: #{tpu_custom_call.1} parent=5 // pred_check
      %p102 = pneg %p101
    $region14: #{tpu_custom_call.1} parent=5 // pred_check_branch
      %104 = sbr.rel (%p102) target = $region16
    $region15: #{tpu_custom_call.1} parent=5 // pred_region
      // Predicated region
      $region17: #{tpu_custom_call.1} parent=15 // pred_check
        %p105 = pneg %p28
      $region18: #{tpu_custom_call.1} parent=15 // pred_check_branch
        %107 = sbr.rel (%p105) target = $region20
      $region19: #{tpu_custom_call.1} parent=15 // pred_region
        %p108 = scmp.lt.s32.totalorder %s8, 1
        %s109 = scalar_select %p108, %s8, 1
        %s110 = smul.addr %s109, 8
        %s111 = scalar_lea.vmem %s0, %s110
      $region20: #{tpu_custom_call.1} parent=15 // pred_fallthru
        _
      // Predicated region
      $region21: #{tpu_custom_call.1} parent=15 // pred_check
        %p112 = pneg %p54
      $region22: #{tpu_custom_call.1} parent=15 // pred_check_branch
        %114 = sbr.rel (%p112) target = $region24
      $region23: #{tpu_custom_call.1} parent=15 // pred_region
        %p115 = scmp.lt.s32.totalorder %s8, 1
        %s116 = scalar_select %p115, %s8, 1
        %s117 = smul.addr %s116, 8
        %s118 = scalar_lea.vmem %s1, %s117
      $region24: #{tpu_custom_call.1} parent=15 // pred_fallthru
        _
    $region16: #{tpu_custom_call.1} parent=5 // pred_fallthru
      _
    %p119 = scmp.le.s32.totalorder 1, %s8
    %p120 = scmp.lt.s32.totalorder %s8, 3
    %p121 = pnand %p119, %p120
    %p122 = pneg %p121
    // Predicated region
    $region25: #{tpu_custom_call.1} parent=5 // pred_check
      _
    $region26: #{tpu_custom_call.1} parent=5 // pred_check_branch
      %124 = sbr.rel (%p121) target = $region28
    $region27: #{tpu_custom_call.1} parent=5 // pred_region
      %s125 = ssub.s32 %s8, 1
      %p126 = scmp.lt.s32.totalorder %s13, 1
      %s127 = scalar_select %p126, %s13, 1
      %s128 = smul.addr %s127, 8
      %s129 = scalar_lea.vmem %s0, %s128
      %p130 = pneg %p34
      %p131 = pneg %p31
      %p132 = scmp.lt.s32.totalorder %s13, 1
      %s133 = scalar_select %p132, %s13, 1
      %s134 = smul.addr %s133, 8
      %s135 = scalar_lea.vmem %s1, %s134
      %p136 = pneg %p60
      %p137 = pneg %p57
      %p138 = pneg %p86
      %p139 = pneg %p83
      %p140 = scmp.lt.s32.totalorder %s13, 1
      %s141 = scalar_select %p140, %s13, 1
      %s142 = smul.addr %s141, 8
      %s143 = scalar_lea.vmem %s2, %s142
      %p144 = scmp.lt.s32.totalorder %s13, 1
      %s145 = scalar_select %p144, %s13, 1
      %s146 = smul.addr %s145, 8
      %s147 = scalar_lea.vmem %s0, %s146
      %p148 = scmp.lt.s32.totalorder %s13, 1
      %s149 = scalar_select %p148, %s13, 1
      %s150 = smul.addr %s149, 8
      %s151 = scalar_lea.vmem %s1, %s150
      %p152 = scmp.lt.s32.totalorder %s13, 1
      %s153 = scalar_select %p152, %s13, 1
      %s154 = smul.addr %s153, 8
      %s155 = scalar_lea.vmem %s2, %s154
      %v156 = vld [vmem:[%s147] sm:$0xff]
      %v157 = vld [vmem:[%s151] sm:$0xff]
      %158 = vmax.xlane.f32.xlu0 %v156
      %v159 = vpop.xlane.xlu0 %158
      %v160 = vsub.f32 %v156, %v159
      %v161 = vmul.f32 %v160, 1.442695
      %v162 = vpow.pop %v161
      %163 = vadd.xlane.f32.xlu0 %v162
      %v164 = vpop.xlane.xlu0 %163
      %v165 = vlaneseq
      %v166 = vand.u32 %v165, 127
      %167 = vset.pattern.permute.xlu0 0
      %168 = vperm.xlu0 %167, %v157
      %v169 = vpop.permute.xlu0 %168
      %vm170 = vcmp.eq.s32.totalorder %v166, %v169
      %v171 = vsel %vm170, %v162, 0.0
      %172 = vadd.xlane.f32.xlu0 %v171
      %v173 = vpop.xlane.xlu0 %172
      %v174 = vrcp.pop %v164
      %v175 = vmul.f32 %v173, %v174
      %vm176 = vcmask 7168
      %177 = vst.msk [vmem:[%s155] sm:$0xff] %vm176, %v175
      %p178 = scmp.lt.s32.totalorder %s13, 1
      %s179 = scalar_select %p178, %s13, 1
      %s180 = smul.addr %s179, 8
      %s181 = scalar_lea.vmem %s2, %s180
      // Predicated region
      $region29: #{tpu_custom_call.1} parent=27 // pred_check
        %p182 = pneg %p83
      $region30: #{tpu_custom_call.1} parent=27 // pred_check_branch
        %184 = sbr.rel (%p182) target = $region32
      $region31: #{tpu_custom_call.1} parent=27 // pred_region
        _
      $region32: #{tpu_custom_call.1} parent=27 // pred_fallthru
        _
    $region28: #{tpu_custom_call.1} parent=5 // pred_fallthru
      _
    %p185 = scmp.le.s32.totalorder 2, %s8
    // Predicated region
    $region33: #{tpu_custom_call.1} parent=5 // pred_check
      %p186 = pneg %p185
    $region34: #{tpu_custom_call.1} parent=5 // pred_check_branch
      %188 = sbr.rel (%p186) target = $region36
    $region35: #{tpu_custom_call.1} parent=5 // pred_region
      %s189 = ssub.s32 %s8, 2
      // Predicated region
      $region37: #{tpu_custom_call.1} parent=35 // pred_check
        %p190 = pneg %p89
      $region38: #{tpu_custom_call.1} parent=35 // pred_check_branch
        %192 = sbr.rel (%p190) target = $region40
      $region39: #{tpu_custom_call.1} parent=35 // pred_region
        %p193 = scmp.lt.s32.totalorder %s14, 1
        %s194 = scalar_select %p193, %s14, 1
        %s195 = smul.addr %s194, 8
        %s196 = scalar_lea.vmem %s2, %s195
      $region40: #{tpu_custom_call.1} parent=35 // pred_fallthru
        _
    $region36: #{tpu_custom_call.1} parent=5 // pred_fallthru
      _
  $region6: #{tpu_custom_call.1} parent=0 // loop_footer
    %s12 = sadd.s32 1, %s8
  $region7: #{tpu_custom_call.1} parent=0 // loop_footer_branch
    %7 = sbr.rel target = $region3
  $region8: #{tpu_custom_call.1} parent=0 // loop_exit
    _

</llo_original>
